<compile_context>
chip_gen: v7x
topology: tpu7x:2x2x1
jax: 0.10.0
libtpu: 0.0.40
codegen_flags: <defaults>
</compile_context>

<pallas_src>
import functools

import jax
import jax.numpy as jnp
from jax.experimental import pallas as pl
from jax.experimental.pallas import tpu as pltpu


def _lag_kernel(x_ref, o_ref, *, inv_hw):
    # x_ref / o_ref: (row_tile, hw) VMEM tiles; each row is one (b, c) slice.
    x = x_ref[...]
    # Reduce in f32 for accuracy; use sum * (1/hw) so the scale is a folded
    # Python constant (and stays correct if hw padding is ever introduced).
    s = jnp.sum(x.astype(jnp.float32), axis=-1, keepdims=True)
    gate = jax.nn.sigmoid(s * inv_hw)
    # Broadcast multiply in the native dtype (bf16 VALUs on v6e/v7x halve the
    # VPU/vreg cost; f32 inputs take the f32 path v5e needs anyway).
    o_ref[...] = (x * gate.astype(x.dtype)).astype(o_ref.dtype)


def _pick_row_tile(rows, hw, itemsize):
    """Largest row tile that (a) keeps the double-buffered in+out footprint
    (~4x block bytes) well inside VMEM on every generation incl. v7x's 64 MiB,
    (b) keeps >=~8 grid steps for pipeline depth / megacore sharding, and
    (c) is a multiple of the dtype's sublane packing."""
    packing = 8 * max(1, 4 // itemsize)           # f32: 8, bf16: 16, int8: 32
    if rows <= packing:
        return rows                               # block == full dim -> valid
    # <= 4 MiB per block  =>  <= ~16 MiB pipelined footprint (in + out, 2x buf)
    max_by_vmem = max(packing, (4 * 1024 * 1024) // (hw * itemsize))
    by_steps = max(packing, -(-rows // 8))        # aim for >= 8 grid steps
    row_tile = min(max_by_vmem, by_steps, rows)
    return max(packing, (row_tile // packing) * packing)


def lag_layer_forward(x):
    """x: (b, c, h, w) float array -> x * sigmoid(mean over (h, w))."""
    b, c, h, w = x.shape
    rows, hw = b * c, h * w
    itemsize = jnp.dtype(x.dtype).itemsize

    # Flatten to a 2-D slab: rows = (b, c) pairs, lanes = spatial.
    # No wrapper-side jnp.pad (that would add a full extra HBM pass):
    # pl.cdiv grid + masked partial last block handles rows % row_tile.
    x2d = x.reshape(rows, hw)

    row_tile = _pick_row_tile(rows, hw, itemsize)
    grid = (pl.cdiv(rows, row_tile),)

    # TODO(synk): for extremely large hw (> a few MiB per row) add a second
    # 'arbitrary' grid axis over hw with a per-row partial-sum accumulator
    # instead of shrinking row_tile.

    kernel = functools.partial(_lag_kernel, inv_hw=float(1.0 / hw))

    out2d = pl.pallas_call(
        kernel,
        out_shape=jax.ShapeDtypeStruct((rows, hw), x.dtype),
        grid_spec=pltpu.PrefetchScalarGridSpec(
            num_scalar_prefetch=0,
            grid=grid,
            in_specs=[pl.BlockSpec((row_tile, hw), lambda i: (i, 0))],
            out_specs=pl.BlockSpec((row_tile, hw), lambda i: (i, 0)),
        ),
        compiler_params=pltpu.CompilerParams(
            dimension_semantics=("parallel",),   # megacore sharding on v7x
            vmem_limit_bytes=48 * 1024 * 1024,   # room for large blocks, safe on 64 MiB v7x
        ),
    )(x2d)

    return out2d.reshape(b, c, h, w)


def lag_layer_reference(x):
    # Pure-JAX reference matching the PyTorch module.
    y = jnp.mean(x, axis=(2, 3), keepdims=True)
    y = jax.nn.sigmoid(y)
    return x * y


if __name__ == "__main__":
    key = jax.random.PRNGKey(0)
    b, c, h, w = 2, 4, 16, 16
    x = jax.random.normal(key, (b, c, h, w), dtype=jnp.float32)

    out = lag_layer_forward(x)
    out = jax.block_until_ready(out)

    ref = lag_layer_reference(x)
    assert out.shape == (b, c, h, w)
    assert jnp.allclose(out, ref, atol=1e-5, rtol=1e-5), (
        f"max abs err = {jnp.max(jnp.abs(out - ref))}"
    )
    print("KERNEL_OK")
</pallas_src>

<mosaic_0001>
module attributes {stable_mosaic.version = 11 : i64} {
  func.func @_lag_kernel(%arg0: i32, %arg1: memref<8x256xf32, #tpu.memory_space<vmem>>, %arg2: memref<8x256xf32, #tpu.memory_space<vmem>>) attributes {dimension_semantics = [#tpu.dimension_semantics<parallel>], iteration_bounds = array<i64: 1>, scalar_prefetch = 0 : i64, scratch_operands = 0 : i64, tpu.core_type = #tpu.core_type<tc>, window_params = [{transform_indices = @transform_0, window_bounds = array<i64: 8, 256>}, {transform_indices = @transform_1, window_bounds = array<i64: 8, 256>}]} {
    %c0 = arith.constant 0 : index
    %c0_0 = arith.constant 0 : index
    %0 = vector.load %arg1[%c0, %c0_0] : memref<8x256xf32, #tpu.memory_space<vmem>>, vector<8x256xf32>
    %cst = arith.constant dense<0.000000e+00> : vector<8xf32>
    %1 = vector.multi_reduction <add>, %0, %cst [1] : vector<8x256xf32> to vector<8xf32>
    %2 = vector.shape_cast %1 : vector<8xf32> to vector<8x1xf32>
    %cst_1 = arith.constant 3.906250e-03 : f32
    %3 = vector.broadcast %cst_1 : f32 to vector<8x1xf32>
    %4 = arith.mulf %2, %3 : vector<8x1xf32>
    %5 = arith.negf %4 : vector<8x1xf32>
    %6 = math.exp %5 : vector<8x1xf32>
    %cst_2 = arith.constant 1.000000e+00 : f32
    %7 = vector.broadcast %cst_2 : f32 to vector<8x1xf32>
    %8 = arith.addf %7, %6 : vector<8x1xf32>
    %9 = arith.divf %7, %8 : vector<8x1xf32>
    %10 = vector.broadcast %9 : vector<8x1xf32> to vector<8x256xf32>
    %11 = arith.mulf %0, %10 : vector<8x256xf32>
    %c0_3 = arith.constant 0 : index
    %c0_4 = arith.constant 0 : index
    %12 = vector.load %arg2[%c0_3, %c0_4] : memref<8x256xf32, #tpu.memory_space<vmem>>, vector<8x256xf32>
    tpu.vector_store %arg2[%c0_3, %c0_4], %11 {strides = array<i32>} : memref<8x256xf32, #tpu.memory_space<vmem>>, vector<8x256xf32>,
    return
  }
  func.func @transform_0(%arg0: i32) -> (i32, i32) {
    %c0_i32 = arith.constant 0 : i32
    %c0_i32_0 = arith.constant 0 : i32
    return %arg0, %c0_i32 : i32, i32
  }
  func.func @transform_1(%arg0: i32) -> (i32, i32) {
    %c0_i32 = arith.constant 0 : i32
    %c0_i32_0 = arith.constant 0 : i32
    return %arg0, %c0_i32 : i32, i32
  }
}

</mosaic_0001>

<llo_original>
// kernel: tpu_custom_call.1
$region0: #{tpu_custom_call.1}
  #allocation0 [shape = 'u32[]', space=smem, size = 0x4, offset = 0x4, fixed_abs, tag = 'smem constant byte address 0x4 - core index']
  #allocation1 [shape = 'u32[144,128]{1,0:T(1,128)}', space=vmem, size = 0x12000, scoped, tag = 'internal scratch']
  %s0 = inlined_call_operand.hbm [shape: f32[8,256], index: 0, kind: input, shape index: {}]
  %s1 = inlined_call_operand.hbm [shape: f32[8,256], index: 1, kind: output, shape index: {}]
  %s2 = sld [smem:[#allocation0]]
  $region18: #{tpu_custom_call.1} parent=0
    _
  %s4 = ssub.s32 1, %s2
  %s5 = scalar_select 0, %s4, %s2
  $region1: #{tpu_custom_call.1} parent=0
    #allocation2 [shape = 'u8[8192]{0}', space=vmem, size = 0x2000, scoped, tag = 'input window, operand 0, single buffered']
    #allocation3 [shape = 's32[1]{0}', space=sflag, size = 0x4, scoped, tag = 'scoped memory for tpu_custom_call.1']
    #allocation4 [shape = 's32[1]{0}', space=sflag, size = 0x4, scoped, tag = 'scoped memory for tpu_custom_call.1']
    #allocation5 [shape = 'u8[8192]{0}', space=vmem, size = 0x2000, scoped, tag = 'output window, operand 0, single buffered']
    %6 = vsyncpa [#allocation3], 0
    %7 = vsyncpa [#allocation4], 0
    // Predicated region
    $region2: #{tpu_custom_call.1} parent=1 // pred_check
      _
    $region3: #{tpu_custom_call.1} parent=1 // pred_check_branch
      %9 = sbr.rel (0) target = $region5
    $region4: #{tpu_custom_call.1} parent=1 // pred_region
      %s11 = ssub.s32 256, 256
      %12 = vsyncadd [#allocation3], %s11
      %s14 = sshll.u32 [#allocation2], 4
      %s15 = int_to_ptr.vmem [resolvable:$true] %s14
      %17 = dma.hbm_to_vmem [thread:$0]  %s0, 256, %s15, [#allocation3]
    $region5: #{tpu_custom_call.1} parent=1 // pred_fallthru
      _
    // Predicated region
    $region6: #{tpu_custom_call.1} parent=1 // pred_check
      _
    $region7: #{tpu_custom_call.1} parent=1 // pred_check_branch
      %19 = sbr.rel (0) target = $region9
    $region8: #{tpu_custom_call.1} parent=1 // pred_region
      %20 = dma.done [#allocation3], 256
    $region9: #{tpu_custom_call.1} parent=1 // pred_fallthru
      _
    %v21 = vld [vmem:[#allocation2] sm:$0xff]
    %v22 = vld [vmem:[#allocation2 + $0x8] sm:$0xff]
    %v23 = vadd.f32 %v21, %v22
    %24 = vadd.xlane.f32.xlu0 %v23
    %v25 = vpop.xlane.xlu0 %24
    %v26 = vmul.f32 %v25, 0.00390625
    %v27 = vxor.u32 %v26, 2147483648
    %v28 = vmul.f32 %v27, 1.442695
    %v29 = vpow.pop %v28
    %v30 = vadd.f32 %v29, 1.0
    %v31 = vrcp.pop %v30
    %v32 = vmul.f32 1.0, %v31
    %v33 = vmul.f32 %v21, %v32
    %v34 = vmul.f32 %v22, %v32
    %35 = vst [vmem:[#allocation5] sm:$0xff] %v33
    %36 = vst [vmem:[#allocation5 + $0x8] sm:$0xff] %v34
    // Predicated region
    $region10: #{tpu_custom_call.1} parent=1 // pred_check
      _
    $region11: #{tpu_custom_call.1} parent=1 // pred_check_branch
      %38 = sbr.rel (0) target = $region13
    $region12: #{tpu_custom_call.1} parent=1 // pred_region
      %s40 = ssub.s32 256, 256
      %41 = vsyncadd [#allocation4], %s40
      %s43 = sshll.u32 [#allocation5], 4
      %s44 = int_to_ptr.vmem [resolvable:$true] %s43
      %46 = dma.vmem_to_hbm [thread:$0]  %s44, 256, %s1, [#allocation4]
    $region13: #{tpu_custom_call.1} parent=1 // pred_fallthru
      _
    // Predicated region
    $region14: #{tpu_custom_call.1} parent=1 // pred_check
      _
    $region15: #{tpu_custom_call.1} parent=1 // pred_check_branch
      %48 = sbr.rel (0) target = $region17
    $region16: #{tpu_custom_call.1} parent=1 // pred_region
      %49 = dma.done [#allocation4], 256
    $region17: #{tpu_custom_call.1} parent=1 // pred_fallthru
      _
    %50 = vsyncpa [#allocation3], 1
    %51 = vsyncpa [#allocation4], 1

</llo_original>
